<compile_context>
chip_gen: v7x
topology: tpu7x:2x2x1
jax: 0.10.0
libtpu: 0.0.40
codegen_flags: <defaults>
</compile_context>

<pallas_src>
import functools

import jax
import jax.numpy as jnp
from jax.experimental import pallas as pl
from jax.experimental.pallas import tpu as pltpu

_LANE = 128


def _dw_kernel(x_hbm, w_ref, b_ref, o_ref, xbuf, sem, *,
               KH, KW, th_out, WO, stride, mult):
    """One grid step: (th_in, Wp, 128) haloed row tile -> (mult, th_out, WO, 128).

    x_hbm: (N, Hp_tot, Wp, C_pad) in HBM (pl.ANY); rows DMA'd manually.
    w_ref: (mult, KH*KW, 128) f32 tap lane-vectors in VMEM.
    b_ref: (mult, 128)        f32 bias lane-vectors in VMEM.
    o_ref: (1, mult, th_out, WO, 128)
    xbuf : VMEM scratch (2, th_in, Wp, 128) double buffer.
    sem  : DMA semaphores (2,).
    """
    ct = pl.program_id(0)
    n = pl.program_id(1)
    h = pl.program_id(2)
    th_in = (th_out - 1) * stride + KH
    lane0 = pl.multiple_of(ct * _LANE, _LANE)

    def fetch(h_idx, slot):
        row0 = h_idx * (th_out * stride)
        pltpu.make_async_copy(
            x_hbm.at[n, pl.ds(row0, th_in), :, pl.ds(lane0, _LANE)],
            xbuf.at[slot], sem.at[slot]).start()

    slot = h % 2

    # First tile of each (ct, n) sweep: fetch the current rows (exposed DMA).
    @pl.when(h == 0)
    def _():
        fetch(h, slot)

    # Wait for the current tile (dst/sem shapes must match the issued copy;
    # the source indices of the wait descriptor are irrelevant).
    pltpu.make_async_copy(
        x_hbm.at[n, pl.ds(0, th_in), :, pl.ds(lane0, _LANE)],
        xbuf.at[slot], sem.at[slot]).wait()

    # Prefetch the next row tile into the other slot while we compute.
    @pl.when(h + 1 < pl.num_programs(2))
    def _():
        fetch(h + 1, 1 - slot)

    w = w_ref[...].astype(jnp.float32)          # (mult, KH*KW, 128), tiny
    b = b_ref[...].astype(jnp.float32)          # (mult, 128)

    # Bias-initialized f32 accumulators (one per channel multiplier).
    accs = [jnp.broadcast_to(b[m].reshape(1, 1, _LANE), (th_out, WO, _LANE))
            for m in range(mult)]

    # (kh, kw) outermost: each shifted window is loaded from the ref once and
    # reused for all `mult` accumulators; cast to f32 at the point of use.
    for kh in range(KH):
        for kw in range(KW):
            if stride == 1:
                win = xbuf[slot, pl.ds(kh, th_out), pl.ds(kw, WO), :]
            else:
                hs = (th_out - 1) * stride + 1
                ws = (WO - 1) * stride + 1
                win = xbuf[slot, pl.ds(kh, hs), pl.ds(kw, ws), :]
                win = win[::stride, ::stride, :]
            win = win.astype(jnp.float32)
            for m in range(mult):
                tap = w[m, kh * KW + kw].reshape(1, 1, _LANE)
                accs[m] = accs[m] + win * tap    # lane-dense VPU FMA

    for m in range(mult):
        o_ref[0, m] = accs[m].astype(o_ref.dtype)


@functools.partial(jax.jit, static_argnames=("stride", "padding", "row_tile"))
def depthwise_conv2d(x, weight, bias, *, stride=1, padding=0, row_tile=None):
    """x: (N, C, H, W); weight: (out_ch, 1, KH, KW); bias: (out_ch,).

    Matches nn.Conv2d(in_ch=C, out_ch, kernel_size, stride, padding,
    groups=C, bias=True).  out_ch must be a multiple of C.
    """
    N, C, H, W = x.shape
    out_ch, _, KH, KW = weight.shape
    assert out_ch % C == 0, "depthwise conv requires out_ch % in_ch == 0"
    mult = out_ch // C

    Hp, Wp = H + 2 * padding, W + 2 * padding
    HO = (Hp - KH) // stride + 1
    WO = (Wp - KW) // stride + 1

    C_pad = -(-C // _LANE) * _LANE
    n_ct = C_pad // _LANE

    itemsize = jnp.dtype(x.dtype).itemsize
    if row_tile is None:
        # Size the H-tile so double-buffered input rows + pipelined output
        # block + f32 accumulators stay around ~24 MiB (fits the v7x budget).
        budget = 24 * 1024 * 1024
        t = HO
        while t > 8:
            ti = (t - 1) * stride + KH
            need = ((2 * ti * Wp + 2 * mult * t * WO) * _LANE * itemsize
                    + mult * t * WO * _LANE * 4)
            if need <= budget:
                break
            t = -(-t // 2)
        row_tile = t
    row_tile = max(1, min(int(row_tile), HO))

    n_ht = -(-HO // row_tile)
    HO_pad = n_ht * row_tile
    th_in = (row_tile - 1) * stride + KH
    Hp_need = (HO_pad - 1) * stride + KH
    extra_h = max(0, Hp_need - Hp)

    # NCHW -> channel-on-lane slab; spatial + channel + H-tile padding fused
    # into the single layout-rewrite pass.
    x_l = jnp.transpose(x, (0, 2, 3, 1))
    x_l = jnp.pad(x_l, ((0, 0), (padding, padding + extra_h),
                        (padding, padding), (0, C_pad - C)))

    # weight[c*mult + m, 0, kh, kw] -> w_l[m, kh*KW + kw, c]  (lane = channel).
    w_l = jnp.transpose(weight.reshape(C, mult, KH * KW), (1, 2, 0))
    w_l = jnp.pad(w_l, ((0, 0), (0, 0), (0, C_pad - C))).astype(jnp.float32)
    b_l = jnp.pad(bias.reshape(C, mult).T,
                  ((0, 0), (0, C_pad - C))).astype(jnp.float32)

    kernel = functools.partial(_dw_kernel, KH=KH, KW=KW, th_out=row_tile,
                               WO=WO, stride=stride, mult=mult)

    out = pl.pallas_call(
        kernel,
        out_shape=jax.ShapeDtypeStruct((N, mult, HO_pad, WO, C_pad), x.dtype),
        grid_spec=pltpu.PrefetchScalarGridSpec(
            num_scalar_prefetch=0,
            # ct outermost so the tiny weight/bias blocks keep a constant
            # block index across the (n, h) sweep and are not re-DMAed.
            grid=(n_ct, N, n_ht),
            in_specs=[
                pl.BlockSpec(memory_space=pl.ANY),      # x stays in HBM
                pl.BlockSpec((mult, KH * KW, _LANE),
                             lambda ct, n, h: (0, 0, ct)),
                pl.BlockSpec((mult, _LANE), lambda ct, n, h: (0, ct)),
            ],
            out_specs=pl.BlockSpec((1, mult, row_tile, WO, _LANE),
                                   lambda ct, n, h: (n, 0, h, 0, ct)),
            scratch_shapes=[
                pltpu.VMEM((2, th_in, Wp, _LANE), x.dtype),   # halo row tiles
                pltpu.SemaphoreType.DMA((2,)),
            ]),
        compiler_params=pltpu.CompilerParams(
            dimension_semantics=("parallel", "parallel", "arbitrary"),
            vmem_limit_bytes=48 * 1024 * 1024),
    )(x_l, w_l, b_l)

    # (N, mult, HO, WO, C) -> PyTorch NCHW with oc = c*mult + m.
    out = out[:, :, :HO, :, :C]
    out = jnp.transpose(out, (0, 4, 1, 2, 3))
    return out.reshape(N, C * mult, HO, WO)


if __name__ == "__main__":
    key = jax.random.PRNGKey(0)
    kx, kw1, kb1, kw2, kb2 = jax.random.split(key, 5)

    # Small shapes consistent with the module (in_ch = 4, k = 3).
    N, C, H, W = 2, 4, 16, 16
    KH = KW = 3

    x = jax.random.normal(kx, (N, C, H, W), jnp.float32)

    def conv_init(kw_key, kb_key, out_ch):
        # Deterministic Conv2d-style init: U(-1/sqrt(fan_in), 1/sqrt(fan_in)).
        fan_in = 1 * KH * KW
        bound = 1.0 / (fan_in ** 0.5)
        weight = jax.random.uniform(kw_key, (out_ch, 1, KH, KW), jnp.float32,
                                    -bound, bound)
        bias = jax.random.uniform(kb_key, (out_ch,), jnp.float32, -bound, bound)
        return weight, bias

    def ref_conv(x, weight, bias, stride, padding, groups):
        # Same semantics as nn.Conv2d(groups=C).
        return jax.lax.conv_general_dilated(
            x, weight, window_strides=(stride, stride),
            padding=((padding, padding), (padding, padding)),
            dimension_numbers=("NCHW", "OIHW", "NCHW"),
            feature_group_count=groups,
            precision=jax.lax.Precision.HIGHEST) + bias[None, :, None, None]

    ok = True

    # Case 1: out_ch == in_ch, stride 1, no padding; row_tile=8 forces 2
    # H-tiles -> exercises the manual double-buffered halo DMA path.
    w1, b1 = conv_init(kw1, kb1, C)
    out1 = jax.block_until_ready(
        depthwise_conv2d(x, w1, b1, stride=1, padding=0, row_tile=8))
    ref1 = ref_conv(x, w1, b1, 1, 0, C)
    ok &= out1.shape == (N, C, H - KH + 1, W - KW + 1)
    ok &= bool(jnp.allclose(out1, ref1, atol=1e-5, rtol=1e-5))

    # Case 2: channel multiplier 2 with padding=1, still groups=C, H-tiled.
    w2, b2 = conv_init(kw2, kb2, 2 * C)
    out2 = jax.block_until_ready(
        depthwise_conv2d(x, w2, b2, stride=1, padding=1, row_tile=8))
    ref2 = ref_conv(x, w2, b2, 1, 1, C)
    ok &= out2.shape == (N, 2 * C, H, W)
    ok &= bool(jnp.allclose(out2, ref2, atol=1e-5, rtol=1e-5))

    # Case 3: auto row tile (single H-tile at this size).
    out3 = jax.block_until_ready(depthwise_conv2d(x, w1, b1, stride=1, padding=0))
    ok &= bool(jnp.allclose(out3, ref1, atol=1e-5, rtol=1e-5))

    assert ok
    print("KERNEL_OK")
</pallas_src>

<mosaic_0001>
module attributes {stable_mosaic.version = 11 : i64} {
  func.func @_dw_kernel(%arg0: i32, %arg1: i32, %arg2: i32, %arg3: memref<2x18x16x128xf32, #tpu.memory_space<any>>, %arg4: memref<1x9x128xf32, #tpu.memory_space<vmem>>, %arg5: memref<1x128xf32, #tpu.memory_space<vmem>>, %arg6: memref<1x1x8x14x128xf32, #tpu.memory_space<vmem>>, %arg7: memref<2x10x16x128xf32, #tpu.memory_space<vmem>>, %arg8: memref<2x!tpu.dma_semaphore, #tpu.memory_space<semaphore_mem>>) attributes {dimension_semantics = [#tpu.dimension_semantics<parallel>, #tpu.dimension_semantics<parallel>, #tpu.dimension_semantics<arbitrary>], iteration_bounds = array<i64: 1, 2, 2>, scalar_prefetch = 0 : i64, scratch_operands = 2 : i64, tpu.core_type = #tpu.core_type<tc>, window_params = [{}, {transform_indices = @transform_1, window_bounds = array<i64: 1, 9, 128>}, {transform_indices = @transform_2, window_bounds = array<i64: 1, 128>}, {transform_indices = @transform_3, window_bounds = array<i64: 1, 1, 8, 14, 128>}]} {
    %c128_i32 = arith.constant 128 : i32
    %0 = arith.muli %arg0, %c128_i32 : i32
    %1 = tpu.assume_multiple %0, 128 : i32
    %c2_i32 = arith.constant 2 : i32
    %c0_i32 = arith.constant 0 : i32
    %2 = arith.cmpi eq, %c2_i32, %c0_i32 : i32
    %c1_i32 = arith.constant 1 : i32
    %3 = arith.select %2, %c1_i32, %c2_i32 : i32
    %4 = arith.remsi %arg2, %3 : i32
    %c0_i32_0 = arith.constant 0 : i32
    %5 = arith.cmpi ne, %4, %c0_i32_0 : i32
    %c0_i32_1 = arith.constant 0 : i32
    %6 = arith.cmpi slt, %4, %c0_i32_1 : i32
    %c0_i32_2 = arith.constant 0 : i32
    %7 = arith.cmpi slt, %3, %c0_i32_2 : i32
    %8 = arith.xori %6, %7 : i1
    %9 = arith.andi %8, %5 : i1
    %10 = arith.addi %4, %3 : i32
    %11 = arith.select %9, %10, %4 : i32
    %c0_i32_3 = arith.constant 0 : i32
    %12 = arith.cmpi eq, %arg2, %c0_i32_3 : i32
    %13 = arith.extui %12 : i1 to i32
    %c0_i32_4 = arith.constant 0 : i32
    %14 = arith.cmpi ne, %13, %c0_i32_4 : i32
    scf.if %14 {
      %c8_i32 = arith.constant 8 : i32
      %115 = arith.muli %arg2, %c8_i32 : i32
      %c0_i32_47 = arith.constant 0 : i32
      %116 = tpu.memref_slice %arg3[%arg1, %115, %c0_i32_47, %1] : memref<2x18x16x128xf32, #tpu.memory_space<any>> -> memref<1x10x16x128xf32, #tpu.memory_space<any>>
      %117 = tpu.memref_squeeze %116 : memref<1x10x16x128xf32, #tpu.memory_space<any>> -> memref<10x16x128xf32, #tpu.memory_space<any>>
      %c0_i32_48 = arith.constant 0 : i32
      %c0_i32_49 = arith.constant 0 : i32
      %c0_i32_50 = arith.constant 0 : i32
      %118 = tpu.memref_slice %arg7[%11, %c0_i32_48, %c0_i32_49, %c0_i32_50] : memref<2x10x16x128xf32, #tpu.memory_space<vmem>> -> memref<1x10x16x128xf32, #tpu.memory_space<vmem>>
      %119 = tpu.memref_squeeze %118 : memref<1x10x16x128xf32, #tpu.memory_space<vmem>> -> memref<10x16x128xf32, #tpu.memory_space<vmem>>
      %120 = tpu.memref_slice %arg8[%11] : memref<2x!tpu.dma_semaphore, #tpu.memory_space<semaphore_mem>> -> memref<1x!tpu.dma_semaphore, #tpu.memory_space<semaphore_mem>>
      %121 = tpu.memref_squeeze %120 : memref<1x!tpu.dma_semaphore, #tpu.memory_space<semaphore_mem>> -> memref<!tpu.dma_semaphore, #tpu.memory_space<semaphore_mem>>
      tpu.enqueue_dma source(%117 : memref<10x16x128xf32, #tpu.memory_space<any>>) target(%119 : memref<10x16x128xf32, #tpu.memory_space<vmem>>) target_semaphore(%121 : memref<!tpu.dma_semaphore, #tpu.memory_space<semaphore_mem>>)
    } else {
    }
    %c0_i32_5 = arith.constant 0 : i32
    %c0_i32_6 = arith.constant 0 : i32
    %15 = tpu.memref_slice %arg3[%arg1, %c0_i32_5, %c0_i32_6, %1] : memref<2x18x16x128xf32, #tpu.memory_space<any>> -> memref<1x10x16x128xf32, #tpu.memory_space<any>>
    %16 = tpu.memref_squeeze %15 : memref<1x10x16x128xf32, #tpu.memory_space<any>> -> memref<10x16x128xf32, #tpu.memory_space<any>>
    %c0_i32_7 = arith.constant 0 : i32
    %c0_i32_8 = arith.constant 0 : i32
    %c0_i32_9 = arith.constant 0 : i32
    %17 = tpu.memref_slice %arg7[%11, %c0_i32_7, %c0_i32_8, %c0_i32_9] : memref<2x10x16x128xf32, #tpu.memory_space<vmem>> -> memref<1x10x16x128xf32, #tpu.memory_space<vmem>>
    %18 = tpu.memref_squeeze %17 : memref<1x10x16x128xf32, #tpu.memory_space<vmem>> -> memref<10x16x128xf32, #tpu.memory_space<vmem>>
    %19 = tpu.memref_slice %arg8[%11] : memref<2x!tpu.dma_semaphore, #tpu.memory_space<semaphore_mem>> -> memref<1x!tpu.dma_semaphore, #tpu.memory_space<semaphore_mem>>
    %20 = tpu.memref_squeeze %19 : memref<1x!tpu.dma_semaphore, #tpu.memory_space<semaphore_mem>> -> memref<!tpu.dma_semaphore, #tpu.memory_space<semaphore_mem>>
    tpu.wait_dma2 semaphore(%20 : memref<!tpu.dma_semaphore, #tpu.memory_space<semaphore_mem>>) src(%16 : memref<10x16x128xf32, #tpu.memory_space<any>>) dst(%18 : memref<10x16x128xf32, #tpu.memory_space<vmem>>)
    %c1_i32_10 = arith.constant 1 : i32
    %21 = arith.addi %arg2, %c1_i32_10 : i32
    %c2_i32_11 = arith.constant 2 : i32
    %22 = arith.cmpi slt, %21, %c2_i32_11 : i32
    %23 = arith.extui %22 : i1 to i32
    %c0_i32_12 = arith.constant 0 : i32
    %24 = arith.cmpi ne, %23, %c0_i32_12 : i32
    scf.if %24 {
      %c1_i32_47 = arith.constant 1 : i32
      %115 = arith.addi %arg2, %c1_i32_47 : i32
      %c1_i32_48 = arith.constant 1 : i32
      %116 = arith.subi %c1_i32_48, %11 : i32
      %c8_i32 = arith.constant 8 : i32
      %117 = arith.muli %115, %c8_i32 : i32
      %c0_i32_49 = arith.constant 0 : i32
      %118 = tpu.memref_slice %arg3[%arg1, %117, %c0_i32_49, %1] : memref<2x18x16x128xf32, #tpu.memory_space<any>> -> memref<1x10x16x128xf32, #tpu.memory_space<any>>
      %119 = tpu.memref_squeeze %118 : memref<1x10x16x128xf32, #tpu.memory_space<any>> -> memref<10x16x128xf32, #tpu.memory_space<any>>
      %c0_i32_50 = arith.constant 0 : i32
      %c0_i32_51 = arith.constant 0 : i32
      %c0_i32_52 = arith.constant 0 : i32
      %120 = tpu.memref_slice %arg7[%116, %c0_i32_50, %c0_i32_51, %c0_i32_52] : memref<2x10x16x128xf32, #tpu.memory_space<vmem>> -> memref<1x10x16x128xf32, #tpu.memory_space<vmem>>
      %121 = tpu.memref_squeeze %120 : memref<1x10x16x128xf32, #tpu.memory_space<vmem>> -> memref<10x16x128xf32, #tpu.memory_space<vmem>>
      %122 = tpu.memref_slice %arg8[%116] : memref<2x!tpu.dma_semaphore, #tpu.memory_space<semaphore_mem>> -> memref<1x!tpu.dma_semaphore, #tpu.memory_space<semaphore_mem>>
      %123 = tpu.memref_squeeze %122 : memref<1x!tpu.dma_semaphore, #tpu.memory_space<semaphore_mem>> -> memref<!tpu.dma_semaphore, #tpu.memory_space<semaphore_mem>>
      tpu.enqueue_dma source(%119 : memref<10x16x128xf32, #tpu.memory_space<any>>) target(%121 : memref<10x16x128xf32, #tpu.memory_space<vmem>>) target_semaphore(%123 : memref<!tpu.dma_semaphore, #tpu.memory_space<semaphore_mem>>)
    } else {
    }
    %c0 = arith.constant 0 : index
    %c0_13 = arith.constant 0 : index
    %c0_14 = arith.constant 0 : index
    %25 = vector.load %arg4[%c0, %c0_13, %c0_14] : memref<1x9x128xf32, #tpu.memory_space<vmem>>, vector<1x9x128xf32>
    %c0_15 = arith.constant 0 : index
    %c0_16 = arith.constant 0 : index
    %26 = vector.load %arg5[%c0_15, %c0_16] : memref<1x128xf32, #tpu.memory_space<vmem>>, vector<1x128xf32>
    %27 = vector.shape_cast %26 : vector<1x128xf32> to vector<128xf32>
    %28 = vector.shape_cast %27 : vector<128xf32> to vector<1x1x128xf32>
    %29 = vector.shape_cast %28 : vector<1x1x128xf32> to vector<1x1x128xf32>
    %30 = vector.broadcast %29 : vector<1x1x128xf32> to vector<8x14x128xf32>
    %31 = arith.index_cast %11 : i32 to index
    %c0_17 = arith.constant 0 : index
    %c0_18 = arith.constant 0 : index
    %c0_19 = arith.constant 0 : index
    %32 = vector.load %arg7[%31, %c0_17, %c0_18, %c0_19] : memref<2x10x16x128xf32, #tpu.memory_space<vmem>>, vector<1x8x14x128xf32>
    %33 = vector.shape_cast %32 : vector<1x8x14x128xf32> to vector<8x14x128xf32>
    %34 = vector.extract_strided_slice %25 {offsets = [0, 0, 0], sizes = [1, 1, 128], strides = [1, 1, 1]} : vector<1x9x128xf32> to vector<1x1x128xf32>
    %35 = vector.shape_cast %34 : vector<1x1x128xf32> to vector<128xf32>
    %36 = vector.shape_cast %35 : vector<128xf32> to vector<1x1x128xf32>
    %37 = vector.broadcast %36 : vector<1x1x128xf32> to vector<8x14x128xf32>
    %38 = arith.mulf %33, %37 : vector<8x14x128xf32>
    %39 = arith.addf %30, %38 : vector<8x14x128xf32>
    %40 = arith.index_cast %11 : i32 to index
    %c0_20 = arith.constant 0 : index
    %c1 = arith.constant 1 : index
    %c0_21 = arith.constant 0 : index
    %41 = vector.load %arg7[%40, %c0_20, %c1, %c0_21] : memref<2x10x16x128xf32, #tpu.memory_space<vmem>>, vector<1x8x14x128xf32>
    %42 = vector.shape_cast %41 : vector<1x8x14x128xf32> to vector<8x14x128xf32>
    %43 = vector.extract_strided_slice %25 {offsets = [0, 1, 0], sizes = [1, 1, 128], strides = [1, 1, 1]} : vector<1x9x128xf32> to vector<1x1x128xf32>
    %44 = vector.shape_cast %43 : vector<1x1x128xf32> to vector<128xf32>
    %45 = vector.shape_cast %44 : vector<128xf32> to vector<1x1x128xf32>
    %46 = vector.broadcast %45 : vector<1x1x128xf32> to vector<8x14x128xf32>
    %47 = arith.mulf %42, %46 : vector<8x14x128xf32>
    %48 = arith.addf %39, %47 : vector<8x14x128xf32>
    %49 = arith.index_cast %11 : i32 to index
    %c0_22 = arith.constant 0 : index
    %c2 = arith.constant 2 : index
    %c0_23 = arith.constant 0 : index
    %50 = vector.load %arg7[%49, %c0_22, %c2, %c0_23] : memref<2x10x16x128xf32, #tpu.memory_space<vmem>>, vector<1x8x14x128xf32>
    %51 = vector.shape_cast %50 : vector<1x8x14x128xf32> to vector<8x14x128xf32>
    %52 = vector.extract_strided_slice %25 {offsets = [0, 2, 0], sizes = [1, 1, 128], strides = [1, 1, 1]} : vector<1x9x128xf32> to vector<1x1x128xf32>
    %53 = vector.shape_cast %52 : vector<1x1x128xf32> to vector<128xf32>
    %54 = vector.shape_cast %53 : vector<128xf32> to vector<1x1x128xf32>
    %55 = vector.broadcast %54 : vector<1x1x128xf32> to vector<8x14x128xf32>
    %56 = arith.mulf %51, %55 : vector<8x14x128xf32>
    %57 = arith.addf %48, %56 : vector<8x14x128xf32>
    %58 = arith.index_cast %11 : i32 to index
    %c1_24 = arith.constant 1 : index
    %c0_25 = arith.constant 0 : index
    %c0_26 = arith.constant 0 : index
    %59 = vector.load %arg7[%58, %c1_24, %c0_25, %c0_26] : memref<2x10x16x128xf32, #tpu.memory_space<vmem>>, vector<1x8x14x128xf32>
    %60 = vector.shape_cast %59 : vector<1x8x14x128xf32> to vector<8x14x128xf32>
    %61 = vector.extract_strided_slice %25 {offsets = [0, 3, 0], sizes = [1, 1, 128], strides = [1, 1, 1]} : vector<1x9x128xf32> to vector<1x1x128xf32>
    %62 = vector.shape_cast %61 : vector<1x1x128xf32> to vector<128xf32>
    %63 = vector.shape_cast %62 : vector<128xf32> to vector<1x1x128xf32>
    %64 = vector.broadcast %63 : vector<1x1x128xf32> to vector<8x14x128xf32>
    %65 = arith.mulf %60, %64 : vector<8x14x128xf32>
    %66 = arith.addf %57, %65 : vector<8x14x128xf32>
    %67 = arith.index_cast %11 : i32 to index
    %c1_27 = arith.constant 1 : index
    %c1_28 = arith.constant 1 : index
    %c0_29 = arith.constant 0 : index
    %68 = vector.load %arg7[%67, %c1_27, %c1_28, %c0_29] : memref<2x10x16x128xf32, #tpu.memory_space<vmem>>, vector<1x8x14x128xf32>
    %69 = vector.shape_cast %68 : vector<1x8x14x128xf32> to vector<8x14x128xf32>
    %70 = vector.extract_strided_slice %25 {offsets = [0, 4, 0], sizes = [1, 1, 128], strides = [1, 1, 1]} : vector<1x9x128xf32> to vector<1x1x128xf32>
    %71 = vector.shape_cast %70 : vector<1x1x128xf32> to vector<128xf32>
    %72 = vector.shape_cast %71 : vector<128xf32> to vector<1x1x128xf32>
    %73 = vector.broadcast %72 : vector<1x1x128xf32> to vector<8x14x128xf32>
    %74 = arith.mulf %69, %73 : vector<8x14x128xf32>
    %75 = arith.addf %66, %74 : vector<8x14x128xf32>
    %76 = arith.index_cast %11 : i32 to index
    %c1_30 = arith.constant 1 : index
    %c2_31 = arith.constant 2 : index
    %c0_32 = arith.constant 0 : index
    %77 = vector.load %arg7[%76, %c1_30, %c2_31, %c0_32] : memref<2x10x16x128xf32, #tpu.memory_space<vmem>>, vector<1x8x14x128xf32>
    %78 = vector.shape_cast %77 : vector<1x8x14x128xf32> to vector<8x14x128xf32>
    %79 = vector.extract_strided_slice %25 {offsets = [0, 5, 0], sizes = [1, 1, 128], strides = [1, 1, 1]} : vector<1x9x128xf32> to vector<1x1x128xf32>
    %80 = vector.shape_cast %79 : vector<1x1x128xf32> to vector<128xf32>
    %81 = vector.shape_cast %80 : vector<128xf32> to vector<1x1x128xf32>
    %82 = vector.broadcast %81 : vector<1x1x128xf32> to vector<8x14x128xf32>
    %83 = arith.mulf %78, %82 : vector<8x14x128xf32>
    %84 = arith.addf %75, %83 : vector<8x14x128xf32>
    %85 = arith.index_cast %11 : i32 to index
    %c2_33 = arith.constant 2 : index
    %c0_34 = arith.constant 0 : index
    %c0_35 = arith.constant 0 : index
    %86 = vector.load %arg7[%85, %c2_33, %c0_34, %c0_35] : memref<2x10x16x128xf32, #tpu.memory_space<vmem>>, vector<1x8x14x128xf32>
    %87 = vector.shape_cast %86 : vector<1x8x14x128xf32> to vector<8x14x128xf32>
    %88 = vector.extract_strided_slice %25 {offsets = [0, 6, 0], sizes = [1, 1, 128], strides = [1, 1, 1]} : vector<1x9x128xf32> to vector<1x1x128xf32>
    %89 = vector.shape_cast %88 : vector<1x1x128xf32> to vector<128xf32>
    %90 = vector.shape_cast %89 : vector<128xf32> to vector<1x1x128xf32>
    %91 = vector.broadcast %90 : vector<1x1x128xf32> to vector<8x14x128xf32>
    %92 = arith.mulf %87, %91 : vector<8x14x128xf32>
    %93 = arith.addf %84, %92 : vector<8x14x128xf32>
    %94 = arith.index_cast %11 : i32 to index
    %c2_36 = arith.constant 2 : index
    %c1_37 = arith.constant 1 : index
    %c0_38 = arith.constant 0 : index
    %95 = vector.load %arg7[%94, %c2_36, %c1_37, %c0_38] : memref<2x10x16x128xf32, #tpu.memory_space<vmem>>, vector<1x8x14x128xf32>
    %96 = vector.shape_cast %95 : vector<1x8x14x128xf32> to vector<8x14x128xf32>
    %97 = vector.extract_strided_slice %25 {offsets = [0, 7, 0], sizes = [1, 1, 128], strides = [1, 1, 1]} : vector<1x9x128xf32> to vector<1x1x128xf32>
    %98 = vector.shape_cast %97 : vector<1x1x128xf32> to vector<128xf32>
    %99 = vector.shape_cast %98 : vector<128xf32> to vector<1x1x128xf32>
    %100 = vector.broadcast %99 : vector<1x1x128xf32> to vector<8x14x128xf32>
    %101 = arith.mulf %96, %100 : vector<8x14x128xf32>
    %102 = arith.addf %93, %101 : vector<8x14x128xf32>
    %103 = arith.index_cast %11 : i32 to index
    %c2_39 = arith.constant 2 : index
    %c2_40 = arith.constant 2 : index
    %c0_41 = arith.constant 0 : index
    %104 = vector.load %arg7[%103, %c2_39, %c2_40, %c0_41] : memref<2x10x16x128xf32, #tpu.memory_space<vmem>>, vector<1x8x14x128xf32>
    %105 = vector.shape_cast %104 : vector<1x8x14x128xf32> to vector<8x14x128xf32>
    %106 = vector.extract_strided_slice %25 {offsets = [0, 8, 0], sizes = [1, 1, 128], strides = [1, 1, 1]} : vector<1x9x128xf32> to vector<1x1x128xf32>
    %107 = vector.shape_cast %106 : vector<1x1x128xf32> to vector<128xf32>
    %108 = vector.shape_cast %107 : vector<128xf32> to vector<1x1x128xf32>
    %109 = vector.broadcast %108 : vector<1x1x128xf32> to vector<8x14x128xf32>
    %110 = arith.mulf %105, %109 : vector<8x14x128xf32>
    %111 = arith.addf %102, %110 : vector<8x14x128xf32>
    %c0_42 = arith.constant 0 : index
    %c0_43 = arith.constant 0 : index
    %c0_44 = arith.constant 0 : index
    %c0_45 = arith.constant 0 : index
    %c0_46 = arith.constant 0 : index
    %112 = vector.load %arg6[%c0_42, %c0_43, %c0_44, %c0_45, %c0_46] : memref<1x1x8x14x128xf32, #tpu.memory_space<vmem>>, vector<1x1x8x14x128xf32>
    %113 = vector.shape_cast %112 : vector<1x1x8x14x128xf32> to vector<8x14x128xf32>
    %114 = vector.shape_cast %111 : vector<8x14x128xf32> to vector<1x1x8x14x128xf32>
    tpu.vector_store %arg6[%c0_42, %c0_43, %c0_44, %c0_45, %c0_46], %114 {strides = array<i32>} : memref<1x1x8x14x128xf32, #tpu.memory_space<vmem>>, vector<1x1x8x14x128xf32>,
    return
  }
  func.func @transform_1(%arg0: i32, %arg1: i32, %arg2: i32) -> (i32, i32, i32) {
    %c0_i32 = arith.constant 0 : i32
    %c0_i32_0 = arith.constant 0 : i32
    %c0_i32_1 = arith.constant 0 : i32
    return %c0_i32, %c0_i32_0, %arg0 : i32, i32, i32
  }
  func.func @transform_2(%arg0: i32, %arg1: i32, %arg2: i32) -> (i32, i32) {
    %c0_i32 = arith.constant 0 : i32
    %c0_i32_0 = arith.constant 0 : i32
    return %c0_i32, %arg0 : i32, i32
  }
  func.func @transform_3(%arg0: i32, %arg1: i32, %arg2: i32) -> (i32, i32, i32, i32, i32) {
    %c0_i32 = arith.constant 0 : i32
    %c0_i32_0 = arith.constant 0 : i32
    %c0_i32_1 = arith.constant 0 : i32
    return %arg1, %c0_i32, %arg2, %c0_i32_0, %arg0 : i32, i32, i32, i32, i32
  }
}

</mosaic_0001>

<llo_original>
// kernel: depthwise_conv2d.1
$region0: #{depthwise_conv2d.1}
  #allocation0 [shape = 'u32[]', space=smem, size = 0x4, offset = 0x4, fixed_abs, tag = 'smem constant byte address 0x4 - core index']
  #allocation1 [shape = 'u32[144,128]{1,0:T(1,128)}', space=vmem, size = 0x12000, scoped, tag = 'internal scratch']
  #allocation2 [shape = 'f32[2,10,16,128]{3,2,1,0:T(8,128)}', space=vmem, size = 0x28000, scoped, tag = 'scratch operand']
  #allocation3 [shape = 's32[2]{0}', space=sflag, size = 0x8, scoped, tag = 'scratch operand']
  #allocation4 [shape = 's32[]', space=sflag, size = 0x4, offset = 0, fixed_abs, tag = 'sflag constant byte address 0x0 - dummy sync flag']
  #allocation5 [shape = 's32[]', space=sflag, size = 0x4, offset = 0, fixed_abs, tag = 'sflag constant byte address 0x0 - dummy sync flag']
  %s0 = inlined_call_operand.vmem [shape: f32[2,18,16,128], index: 0, kind: input, shape index: {}]
  %s1 = inlined_call_operand.vmem [shape: f32[1,9,128], index: 1, kind: input, shape index: {}]
  %s2 = inlined_call_operand.vmem [shape: f32[1,128], index: 2, kind: input, shape index: {}]
  %s3 = inlined_call_operand.vmem [shape: f32[2,1,16,14,128], index: 3, kind: output, shape index: {}]
  %s4 = sld [smem:[#allocation0]]
  $region117: #{depthwise_conv2d.1} parent=0
    _
  %s6 = ssub.s32 1, %s4
  %s7 = scalar_select 0, %s6, %s4
  loop: start=0, step=1, limit=6
  $region2: #{depthwise_conv2d.1} parent=0 // loop_pre_header
    _
  $region3: #{depthwise_conv2d.1} parent=0 // loop_header
    %s9 = sphi 0, %s13
    %p10 = scmp.ge.s32.totalorder %s9, 6
    %s16 = sphi 0, %s35
    %s17 = sphi 0, %s31
    %s18 = sphi 0, %s27
    %s19 = sphi 0, %s16
    %s20 = sphi 0, %s17
    %s21 = sphi 0, %s18
    %s22 = sphi 0, %s19
    %s23 = sphi 0, %s20
    %s24 = sphi 0, %s21
    %s38 = sphi 0, %s40
    %s41 = sphi 0, %s38
    %s42 = sphi 0, %s41
    %s58 = sphi 0, %s42
    %s64 = sphi 0, %s66
    %s67 = sphi 0, %s64
    %s68 = sphi 0, %s67
    %s84 = sphi 0, %s68
    %s94 = sphi 0, %s96
    %s97 = sphi 0, %s94
    %s98 = sphi 0, %s97
    %s114 = sphi 0, %s98
  $region4: #{depthwise_conv2d.1} parent=0 // loop_header_branch
    %12 = sbr.rel (%p10) target = $region8
  $region5: #{depthwise_conv2d.1} parent=0 // loop_body
    %s14 = ssub.s32 %s9, 1
    %s15 = ssub.s32 %s9, 2
    %s25 = sadd.s32 1, %s18
    %p26 = scmp.ge.s32.totalorder %s25, 2
    %s27 = scalar_select %p26, 0, %s25
    %s28 = sadd.s32 1, %s17
    %s29 = scalar_select %p26, %s28, %s17
    %p30 = scmp.ge.s32.totalorder %s29, 2
    %s31 = scalar_select %p30, 0, %s29
    %s32 = sadd.s32 1, %s16
    %s33 = scalar_select %p30, %s32, %s16
    %p34 = scmp.ge.s32.totalorder %s33, 1
    %s35 = scalar_select %p34, 0, %s33
    %s36 = ssub.s32 %s16, %s35
    %p37 = scmp.eq.s32.totalorder %s36, 0
    %s39 = sadd.s32 %s38, 1
    %s40 = scalar_select %p37, %s38, %s39
    %p43 = pneg %p37
    %p44 = scmp.eq.s32.totalorder %s9, 3
    %p45 = por %p43, %p44
    %p46 = scmp.ne.s32.totalorder %s38, %s41
    %p47 = scmp.eq.s32.totalorder %s9, 0
    %p48 = por %p46, %p47
    %p49 = scmp.ne.s32.totalorder %s38, %s41
    %p50 = scmp.eq.s32.totalorder %s14, 3
    %p51 = por %p49, %p50
    %p52 = scmp.ne.s32.totalorder %s41, %s42
    %p53 = scmp.eq.s32.totalorder %s14, 0
    %p54 = por %p52, %p53
    %p55 = scmp.ne.s32.totalorder %s41, %s42
    %p56 = scmp.eq.s32.totalorder %s15, 3
    %p57 = por %p55, %p56
    %p59 = scmp.ne.s32.totalorder %s42, %s58
    %p60 = scmp.eq.s32.totalorder %s15, 0
    %p61 = por %p59, %p60
    %s62 = ssub.s32 %s16, %s35
    %p63 = scmp.eq.s32.totalorder %s62, 0
    %s65 = sadd.s32 %s64, 1
    %s66 = scalar_select %p63, %s64, %s65
    %p69 = pneg %p63
    %p70 = scmp.eq.s32.totalorder %s9, 3
    %p71 = por %p69, %p70
    %p72 = scmp.ne.s32.totalorder %s64, %s67
    %p73 = scmp.eq.s32.totalorder %s9, 0
    %p74 = por %p72, %p73
    %p75 = scmp.ne.s32.totalorder %s64, %s67
    %p76 = scmp.eq.s32.totalorder %s14, 3
    %p77 = por %p75, %p76
    %p78 = scmp.ne.s32.totalorder %s67, %s68
    %p79 = scmp.eq.s32.totalorder %s14, 0
    %p80 = por %p78, %p79
    %p81 = scmp.ne.s32.totalorder %s67, %s68
    %p82 = scmp.eq.s32.totalorder %s15, 3
    %p83 = por %p81, %p82
    %p85 = scmp.ne.s32.totalorder %s68, %s84
    %p86 = scmp.eq.s32.totalorder %s15, 0
    %p87 = por %p85, %p86
    %s88 = ssub.s32 %s17, %s31
    %s89 = ssub.s32 %s18, %s27
    %s90 = sor.u32 %s88, %s89
    %s91 = ssub.s32 %s16, %s35
    %s92 = sor.u32 %s90, %s91
    %p93 = scmp.eq.s32.totalorder %s92, 0
    %s95 = sadd.s32 %s94, 1
    %s96 = scalar_select %p93, %s94, %s95
    %p99 = pneg %p93
    %p100 = scmp.eq.s32.totalorder %s9, 3
    %p101 = por %p99, %p100
    %p102 = scmp.ne.s32.totalorder %s94, %s97
    %p103 = scmp.eq.s32.totalorder %s9, 0
    %p104 = por %p102, %p103
    %p105 = scmp.ne.s32.totalorder %s94, %s97
    %p106 = scmp.eq.s32.totalorder %s14, 3
    %p107 = por %p105, %p106
    %p108 = scmp.ne.s32.totalorder %s97, %s98
    %p109 = scmp.eq.s32.totalorder %s14, 0
    %p110 = por %p108, %p109
    %p111 = scmp.ne.s32.totalorder %s97, %s98
    %p112 = scmp.eq.s32.totalorder %s15, 3
    %p113 = por %p111, %p112
    %p115 = scmp.ne.s32.totalorder %s98, %s114
    %p116 = scmp.eq.s32.totalorder %s15, 0
    %p117 = por %p115, %p116
    %p118 = scmp.le.s32.totalorder 1, %s9
    %p119 = scmp.lt.s32.totalorder %s9, 5
    %p120 = pnand %p118, %p119
    %p121 = pneg %p120
    // Predicated region
    $region9: #{depthwise_conv2d.1} parent=5 // pred_check
      _
    $region10: #{depthwise_conv2d.1} parent=5 // pred_check_branch
      %123 = sbr.rel (%p120) target = $region12
    $region11: #{depthwise_conv2d.1} parent=5 // pred_region
      %s124 = ssub.s32 %s9, 1
      // Predicated region
      $region13: #{depthwise_conv2d.1} parent=11 // pred_check
        %p125 = pneg %p54
      $region14: #{depthwise_conv2d.1} parent=11 // pred_check_branch
        %127 = sbr.rel (%p125) target = $region16
      $region15: #{depthwise_conv2d.1} parent=11 // pred_region
        %p128 = scmp.lt.s32.totalorder %s19, 0
        %s129 = scalar_select %p128, %s19, 0
        %s130 = smul.addr %s129, 8
        %s131 = scalar_lea.vmem %s1, %s130
      $region16: #{depthwise_conv2d.1} parent=11 // pred_fallthru
        _
      // Predicated region
      $region17: #{depthwise_conv2d.1} parent=11 // pred_check
        %p132 = pneg %p80
      $region18: #{depthwise_conv2d.1} parent=11 // pred_check_branch
        %134 = sbr.rel (%p132) target = $region20
      $region19: #{depthwise_conv2d.1} parent=11 // pred_region
        %p135 = scmp.lt.s32.totalorder %s19, 0
        %s136 = scalar_select %p135, %s19, 0
        %s137 = scalar_lea.vmem %s2, %s136
      $region20: #{depthwise_conv2d.1} parent=11 // pred_fallthru
        _
    $region12: #{depthwise_conv2d.1} parent=5 // pred_fallthru
      _
    %p138 = scmp.lt.s32.totalorder %s9, 4
    // Predicated region
    $region21: #{depthwise_conv2d.1} parent=5 // pred_check
      %p139 = pneg %p138
    $region22: #{depthwise_conv2d.1} parent=5 // pred_check_branch
      %141 = sbr.rel (%p139) target = $region24
    $region23: #{depthwise_conv2d.1} parent=5 // pred_region
      _
    $region24: #{depthwise_conv2d.1} parent=5 // pred_fallthru
      _
    %p142 = scmp.le.s32.totalorder 1, %s9
    %p143 = scmp.lt.s32.totalorder %s9, 5
    %p144 = pnand %p142, %p143
    %p145 = pneg %p144
    // Predicated region
    $region25: #{depthwise_conv2d.1} parent=5 // pred_check
      _
    $region26: #{depthwise_conv2d.1} parent=5 // pred_check_branch
      %147 = sbr.rel (%p144) target = $region28
    $region27: #{depthwise_conv2d.1} parent=5 // pred_region
      %s148 = ssub.s32 %s9, 1
      %p149 = scmp.lt.s32.totalorder %s19, 0
      %s150 = scalar_select %p149, %s19, 0
      %s151 = smul.addr %s150, 8
      %s152 = scalar_lea.vmem %s1, %s151
      %p153 = pneg %p54
      %p154 = pneg %p51
      %p155 = scmp.lt.s32.totalorder %s19, 0
      %s156 = scalar_select %p155, %s19, 0
      %s157 = scalar_lea.vmem %s2, %s156
      %p158 = pneg %p80
      %p159 = pneg %p77
      %p160 = pneg %p110
      %p161 = pneg %p107
      %s162 = smul.u32 8, %s21
      %p163 = scmp.lt.s32.totalorder %s20, 1
      %s164 = scalar_select %p163, %s20, 1
      %p165 = scmp.lt.s32.totalorder %s162, 15
      %s166 = scalar_select %p165, %s162, 15
      %p167 = scmp.lt.s32.totalorder %s19, 0
      %s168 = scalar_select %p167, %s19, 0
      %s169 = smul.addr %s166, 2
      %s170 = sadd.s32 %s168, %s169
      %s171 = smul.addr %s164, 32
      %s172 = sadd.s32 %s170, %s171
      %s173 = smul.addr %s172, 8
      %s174 = scalar_lea.vmem %s3, %s173
      %p175 = scmp.lt.s32.totalorder %s19, 0
      %s176 = scalar_select %p175, %s19, 0
      %s177 = smul.addr %s176, 8
      %s178 = scalar_lea.vmem %s1, %s177
      %p179 = scmp.lt.s32.totalorder %s19, 0
      %s180 = scalar_select %p179, %s19, 0
      %s181 = scalar_lea.vmem %s2, %s180
      %s182 = smul.u32 8, %s21
      %p183 = scmp.lt.s32.totalorder %s20, 1
      %s184 = scalar_select %p183, %s20, 1
      %p185 = scmp.lt.s32.totalorder %s182, 15
      %s186 = scalar_select %p185, %s182, 15
      %p187 = scmp.lt.s32.totalorder %s19, 0
      %s188 = scalar_select %p187, %s19, 0
      %s189 = smul.addr %s186, 2
      %s190 = sadd.s32 %s188, %s189
      %s191 = smul.addr %s184, 32
      %s192 = sadd.s32 %s190, %s191
      %s193 = smul.addr %s192, 8
      %s194 = scalar_lea.vmem %s3, %s193
      %s195 = smul.u32 8, %s21
      %s196 = smul.u32 %s19, 128
      %p197 = scmp.lt.s32.totalorder %s21, 0
      %s198 = ssub.s32 0, %s21
      %s199 = scalar_select %p197, %s198, %s21
      %s200 = sand.u32 %s199, 1
      %s201 = ssub.s32 0, %s200
      %s202 = scalar_select %p197, %s201, %s200
      %p203 = scmp.ne.s32.totalorder %s202, 0
      %p204 = scmp.lt.s32.totalorder %s202, 0
      %p205 = pnand %p204, %p203
      %p206 = pneg %p205
      %s207 = sadd.s32 %s202, 2
      %s208 = scalar_select %p206, %s207, %s202
      %p209 = scmp.eq.s32.totalorder %s21, 0
      // Predicated region
      $region29: #{depthwise_conv2d.1} parent=27 // pred_check
        %p210 = pneg %p209
      $region30: #{depthwise_conv2d.1} parent=27 // pred_check_branch
        %212 = sbr.rel (%p210) target = $region32
      $region31: #{depthwise_conv2d.1} parent=27 // pred_region
        %s213 = smul.u32 %s21, 8
        %s214 = sshra.s32 %s196, 7
        %s215 = sand.u32 %s196, 127
        %s216 = smul.u32 %s213, 16
        %s217 = sadd.s32 %s214, %s216
        %s218 = smul.u32 %s20, 288
        %s219 = sadd.s32 %s217, %s218
        %s220 = scalar_lea.vmem %s0, %s219
        %s221 = smul.u32 %s208, 160
        %s222 = scalar_lea.vmem [#allocation2], %s221
        %s223 = scalar_lea.sflag [#allocation3], %s208
        %p225 = scmp.lt.u32.totalorder 160, 8
        %p226 = pneg %p225
        // Predicated region
        $region33: #{depthwise_conv2d.1} parent=31 // pred_check
          _
        $region34: #{depthwise_conv2d.1} parent=31 // pred_check_branch
          %228 = sbr.rel (%p225) target = $region36
        $region35: #{depthwise_conv2d.1} parent=31 // pred_region
          %s243 = sand.u32 160, 7
          %p244 = scmp.eq.s32.totalorder %s243, 0
          // Predicated region
          $region48: #{depthwise_conv2d.1} parent=35 // pred_check
            %p245 = pneg %p244
          $region49: #{depthwise_conv2d.1} parent=35 // pred_check_branch
            %247 = sbr.rel (%p245) target = $region51
          $region50: #{depthwise_conv2d.1} parent=35 // pred_region
            loop: start=0, step=1, limit=1
            $region52: #{depthwise_conv2d.1} parent=50 // loop_pre_header
              _
            $region53: #{depthwise_conv2d.1} parent=50 // loop_header
              %s249 = sphi 0, %s253
              %p250 = scmp.ge.s32.totalorder %s249, 1
              %s254 = sphi %s220, %s220
              %s255 = sphi %s222, %s222
            $region54: #{depthwise_conv2d.1} parent=50 // loop_header_branch
              %252 = sbr.rel (%p250) target = $region58
            $region55: #{depthwise_conv2d.1} parent=50 // loop_body
              %v256 = vld [vmem:[%s254] sm:$0xff]
              %257 = vst [vmem:[%s255] sm:$0xff] %v256
              %v258 = vld [vmem:[%s254 + $0x8] sm:$0xff]
              %259 = vst [vmem:[%s255 + $0x8] sm:$0xff] %v258
              %v260 = vld [vmem:[%s254 + $0x10] sm:$0xff]
              %261 = vst [vmem:[%s255 + $0x10] sm:$0xff] %v260
              %v262 = vld [vmem:[%s254 + $0x18] sm:$0xff]
              %263 = vst [vmem:[%s255 + $0x18] sm:$0xff] %v262
              %v264 = vld [vmem:[%s254 + $0x20] sm:$0xff]
              %265 = vst [vmem:[%s255 + $0x20] sm:$0xff] %v264
              %v266 = vld [vmem:[%s254 + $0x28] sm:$0xff]
              %267 = vst [vmem:[%s255 + $0x28] sm:$0xff] %v266
              %v268 = vld [vmem:[%s254 + $0x30] sm:$0xff]
              %269 = vst [vmem:[%s255 + $0x30] sm:$0xff] %v268
              %v270 = vld [vmem:[%s254 + $0x38] sm:$0xff]
              %271 = vst [vmem:[%s255 + $0x38] sm:$0xff] %v270
              %v272 = vld [vmem:[%s254 + $0x40] sm:$0xff]
              %273 = vst [vmem:[%s255 + $0x40] sm:$0xff] %v272
              %v274 = vld [vmem:[%s254 + $0x48] sm:$0xff]
              %275 = vst [vmem:[%s255 + $0x48] sm:$0xff] %v274
              %v276 = vld [vmem:[%s254 + $0x50] sm:$0xff]
              %277 = vst [vmem:[%s255 + $0x50] sm:$0xff] %v276
              %v278 = vld [vmem:[%s254 + $0x58] sm:$0xff]
              %279 = vst [vmem:[%s255 + $0x58] sm:$0xff] %v278
              %v280 = vld [vmem:[%s254 + $0x60] sm:$0xff]
              %281 = vst [vmem:[%s255 + $0x60] sm:$0xff] %v280
              %v282 = vld [vmem:[%s254 + $0x68] sm:$0xff]
              %283 = vst [vmem:[%s255 + $0x68] sm:$0xff] %v282
              %v284 = vld [vmem:[%s254 + $0x70] sm:$0xff]
              %285 = vst [vmem:[%s255 + $0x70] sm:$0xff] %v284
              %v286 = vld [vmem:[%s254 + $0x78] sm:$0xff]
              %287 = vst [vmem:[%s255 + $0x78] sm:$0xff] %v286
              %v288 = vld [vmem:[%s254 + $0x80] sm:$0xff]
              %289 = vst [vmem:[%s255 + $0x80] sm:$0xff] %v288
              %v290 = vld [vmem:[%s254 + $0x88] sm:$0xff]
              %291 = vst [vmem:[%s255 + $0x88] sm:$0xff] %v290
              %v292 = vld [vmem:[%s254 + $0x90] sm:$0xff]
              %293 = vst [vmem:[%s255 + $0x90] sm:$0xff] %v292
              %v294 = vld [vmem:[%s254 + $0x98] sm:$0xff]
              %295 = vst [vmem:[%s255 + $0x98] sm:$0xff] %v294
            $region56: #{depthwise_conv2d.1} parent=50 // loop_footer
              %s253 = sadd.s32 1, %s249
            $region57: #{depthwise_conv2d.1} parent=50 // loop_footer_branch
              %248 = sbr.rel target = $region53
            $region58: #{depthwise_conv2d.1} parent=50 // loop_exit
              _
          $region51: #{depthwise_conv2d.1} parent=35 // pred_fallthru
            _
          %p296 = pneg %p244
          // Predicated region
          $region59: #{depthwise_conv2d.1} parent=35 // pred_check
            _
          $region60: #{depthwise_conv2d.1} parent=35 // pred_check_branch
            %298 = sbr.rel (%p244) target = $region62
          $region61: #{depthwise_conv2d.1} parent=35 // pred_region
            %s299 = sand.u32 160, 7
          $region62: #{depthwise_conv2d.1} parent=35 // pred_fallthru
            _
        $region36: #{depthwise_conv2d.1} parent=31 // pred_fallthru
          _
        // Predicated region
        $region37: #{depthwise_conv2d.1} parent=31 // pred_check
          %p229 = pneg %p225
        $region38: #{depthwise_conv2d.1} parent=31 // pred_check_branch
          %231 = sbr.rel (%p229) target = $region40
        $region39: #{depthwise_conv2d.1} parent=31 // pred_region
          %s232 = sshllo.u32 0, 160
          loop: start=0, step=1, limit=1
          $region41: #{depthwise_conv2d.1} parent=39 // loop_pre_header
            _
          $region42: #{depthwise_conv2d.1} parent=39 // loop_header
            %s234 = sphi 0, %s238
            %p235 = scmp.ge.s32.totalorder %s234, 1
            %s239 = sphi %s220, %s220
            %s240 = sphi %s222, %s222
          $region43: #{depthwise_conv2d.1} parent=39 // loop_header_branch
            %237 = sbr.rel (%p235) target = $region47
          $region44: #{depthwise_conv2d.1} parent=39 // loop_body
            %v241 = vld [vmem:[%s239] sm:%s232]
            %242 = vst [vmem:[%s240] sm:%s232] %v241
          $region45: #{depthwise_conv2d.1} parent=39 // loop_footer
            %s238 = sadd.s32 1, %s234
          $region46: #{depthwise_conv2d.1} parent=39 // loop_footer_branch
            %233 = sbr.rel target = $region42
          $region47: #{depthwise_conv2d.1} parent=39 // loop_exit
            _
        $region40: #{depthwise_conv2d.1} parent=31 // pred_fallthru
          _
        // Predicated region
        $region63: #{depthwise_conv2d.1} parent=31 // pred_check
          _
        $region64: #{depthwise_conv2d.1} parent=31 // pred_check_branch
          %302 = sbr.rel (0) target = $region66
        $region65: #{depthwise_conv2d.1} parent=31 // pred_region
          %303 = vsyncadd %s223, 2560
        $region66: #{depthwise_conv2d.1} parent=31 // pred_fallthru
          _
      $region32: #{depthwise_conv2d.1} parent=27 // pred_fallthru
        _
      %s304 = scalar_lea.sflag [#allocation3], %s208
      %s305 = smul.u32 10, 16
      %s306 = smul.u32 %s305, 1
      %s307 = sshll.u32 %s306, 4
      %308 = dma.done %s304, %s307
      %s309 = sadd.s32 %s21, 1
      %p310 = scmp.lt.s32.totalorder %s309, 2
      // Predicated region
      $region67: #{depthwise_conv2d.1} parent=27 // pred_check
        %p311 = pneg %p310
      $region68: #{depthwise_conv2d.1} parent=27 // pred_check_branch
        %313 = sbr.rel (%p311) target = $region70
      $region69: #{depthwise_conv2d.1} parent=27 // pred_region
        %s314 = ssub.s32 1, %s208
        %s315 = smul.u32 %s309, 8
        %s316 = sshra.s32 %s196, 7
        %s317 = sand.u32 %s196, 127
        %s318 = smul.u32 %s315, 16
        %s319 = sadd.s32 %s316, %s318
        %s320 = smul.u32 %s20, 288
        %s321 = sadd.s32 %s319, %s320
        %s322 = scalar_lea.vmem %s0, %s321
        %s323 = smul.u32 %s314, 160
        %s324 = scalar_lea.vmem [#allocation2], %s323
        %s325 = scalar_lea.sflag [#allocation3], %s314
        %p327 = scmp.lt.u32.totalorder 160, 8
        %p328 = pneg %p327
        // Predicated region
        $region71: #{depthwise_conv2d.1} parent=69 // pred_check
          _
        $region72: #{depthwise_conv2d.1} parent=69 // pred_check_branch
          %330 = sbr.rel (%p327) target = $region74
        $region73: #{depthwise_conv2d.1} parent=69 // pred_region
          %s345 = sand.u32 160, 7
          %p346 = scmp.eq.s32.totalorder %s345, 0
          // Predicated region
          $region86: #{depthwise_conv2d.1} parent=73 // pred_check
            %p347 = pneg %p346
          $region87: #{depthwise_conv2d.1} parent=73 // pred_check_branch
            %349 = sbr.rel (%p347) target = $region89
          $region88: #{depthwise_conv2d.1} parent=73 // pred_region
            loop: start=0, step=1, limit=1
            $region90: #{depthwise_conv2d.1} parent=88 // loop_pre_header
              _
            $region91: #{depthwise_conv2d.1} parent=88 // loop_header
              %s351 = sphi 0, %s355
              %p352 = scmp.ge.s32.totalorder %s351, 1
              %s356 = sphi %s322, %s322
              %s357 = sphi %s324, %s324
            $region92: #{depthwise_conv2d.1} parent=88 // loop_header_branch
              %354 = sbr.rel (%p352) target = $region96
            $region93: #{depthwise_conv2d.1} parent=88 // loop_body
              %v358 = vld [vmem:[%s356] sm:$0xff]
              %359 = vst [vmem:[%s357] sm:$0xff] %v358
              %v360 = vld [vmem:[%s356 + $0x8] sm:$0xff]
              %361 = vst [vmem:[%s357 + $0x8] sm:$0xff] %v360
              %v362 = vld [vmem:[%s356 + $0x10] sm:$0xff]
              %363 = vst [vmem:[%s357 + $0x10] sm:$0xff] %v362
              %v364 = vld [vmem:[%s356 + $0x18] sm:$0xff]
              %365 = vst [vmem:[%s357 + $0x18] sm:$0xff] %v364
              %v366 = vld [vmem:[%s356 + $0x20] sm:$0xff]
              %367 = vst [vmem:[%s357 + $0x20] sm:$0xff] %v366
              %v368 = vld [vmem:[%s356 + $0x28] sm:$0xff]
              %369 = vst [vmem:[%s357 + $0x28] sm:$0xff] %v368
              %v370 = vld [vmem:[%s356 + $0x30] sm:$0xff]
              %371 = vst [vmem:[%s357 + $0x30] sm:$0xff] %v370
              %v372 = vld [vmem:[%s356 + $0x38] sm:$0xff]
              %373 = vst [vmem:[%s357 + $0x38] sm:$0xff] %v372
              %v374 = vld [vmem:[%s356 + $0x40] sm:$0xff]
              %375 = vst [vmem:[%s357 + $0x40] sm:$0xff] %v374
              %v376 = vld [vmem:[%s356 + $0x48] sm:$0xff]
              %377 = vst [vmem:[%s357 + $0x48] sm:$0xff] %v376
              %v378 = vld [vmem:[%s356 + $0x50] sm:$0xff]
              %379 = vst [vmem:[%s357 + $0x50] sm:$0xff] %v378
              %v380 = vld [vmem:[%s356 + $0x58] sm:$0xff]
              %381 = vst [vmem:[%s357 + $0x58] sm:$0xff] %v380
              %v382 = vld [vmem:[%s356 + $0x60] sm:$0xff]
              %383 = vst [vmem:[%s357 + $0x60] sm:$0xff] %v382
              %v384 = vld [vmem:[%s356 + $0x68] sm:$0xff]
              %385 = vst [vmem:[%s357 + $0x68] sm:$0xff] %v384
              %v386 = vld [vmem:[%s356 + $0x70] sm:$0xff]
              %387 = vst [vmem:[%s357 + $0x70] sm:$0xff] %v386
              %v388 = vld [vmem:[%s356 + $0x78] sm:$0xff]
              %389 = vst [vmem:[%s357 + $0x78] sm:$0xff] %v388
              %v390 = vld [vmem:[%s356 + $0x80] sm:$0xff]
              %391 = vst [vmem:[%s357 + $0x80] sm:$0xff] %v390
              %v392 = vld [vmem:[%s356 + $0x88] sm:$0xff]
              %393 = vst [vmem:[%s357 + $0x88] sm:$0xff] %v392
              %v394 = vld [vmem:[%s356 + $0x90] sm:$0xff]
              %395 = vst [vmem:[%s357 + $0x90] sm:$0xff] %v394
              %v396 = vld [vmem:[%s356 + $0x98] sm:$0xff]
              %397 = vst [vmem:[%s357 + $0x98] sm:$0xff] %v396
            $region94: #{depthwise_conv2d.1} parent=88 // loop_footer
              %s355 = sadd.s32 1, %s351
            $region95: #{depthwise_conv2d.1} parent=88 // loop_footer_branch
              %350 = sbr.rel target = $region91
            $region96: #{depthwise_conv2d.1} parent=88 // loop_exit
              _
          $region89: #{depthwise_conv2d.1} parent=73 // pred_fallthru
            _
          %p398 = pneg %p346
          // Predicated region
          $region97: #{depthwise_conv2d.1} parent=73 // pred_check
            _
          $region98: #{depthwise_conv2d.1} parent=73 // pred_check_branch
            %400 = sbr.rel (%p346) target = $region100
          $region99: #{depthwise_conv2d.1} parent=73 // pred_region
            %s401 = sand.u32 160, 7
          $region100: #{depthwise_conv2d.1} parent=73 // pred_fallthru
            _
        $region74: #{depthwise_conv2d.1} parent=69 // pred_fallthru
          _
        // Predicated region
        $region75: #{depthwise_conv2d.1} parent=69 // pred_check
          %p331 = pneg %p327
        $region76: #{depthwise_conv2d.1} parent=69 // pred_check_branch
          %333 = sbr.rel (%p331) target = $region78
        $region77: #{depthwise_conv2d.1} parent=69 // pred_region
          %s334 = sshllo.u32 0, 160
          loop: start=0, step=1, limit=1
          $region79: #{depthwise_conv2d.1} parent=77 // loop_pre_header
            _
          $region80: #{depthwise_conv2d.1} parent=77 // loop_header
            %s336 = sphi 0, %s340
            %p337 = scmp.ge.s32.totalorder %s336, 1
            %s341 = sphi %s322, %s322
            %s342 = sphi %s324, %s324
          $region81: #{depthwise_conv2d.1} parent=77 // loop_header_branch
            %339 = sbr.rel (%p337) target = $region85
          $region82: #{depthwise_conv2d.1} parent=77 // loop_body
            %v343 = vld [vmem:[%s341] sm:%s334]
            %344 = vst [vmem:[%s342] sm:%s334] %v343
          $region83: #{depthwise_conv2d.1} parent=77 // loop_footer
            %s340 = sadd.s32 1, %s336
          $region84: #{depthwise_conv2d.1} parent=77 // loop_footer_branch
            %335 = sbr.rel target = $region80
          $region85: #{depthwise_conv2d.1} parent=77 // loop_exit
            _
        $region78: #{depthwise_conv2d.1} parent=69 // pred_fallthru
          _
        // Predicated region
        $region101: #{depthwise_conv2d.1} parent=69 // pred_check
          _
        $region102: #{depthwise_conv2d.1} parent=69 // pred_check_branch
          %404 = sbr.rel (0) target = $region104
        $region103: #{depthwise_conv2d.1} parent=69 // pred_region
          %405 = vsyncadd %s325, 2560
        $region104: #{depthwise_conv2d.1} parent=69 // pred_fallthru
          _
      $region70: #{depthwise_conv2d.1} parent=27 // pred_fallthru
        _
      %v406 = vld [vmem:[%s178] sm:$0xff]
      %v407 = vld [vmem:[%s178 + $0x8] sm:$0x1]
      %v408 = vld [vmem:[%s181] sm:$0x1]
      %v410 = vlaneseq
      %v411 = vshrl.u32 %v410, 7
      %v412 = vsub.s32 0, %v411
      %v413 = vrot.slane %v408, %v412
      %s415 = smul.u32 %s208, 160
      %s416 = scalar_lea.vmem [#allocation2], %s415
      %v417 = vld [vmem:[%s416] sm:$0xff]
      %v418 = vld [vmem:[%s416 + $0x8] sm:$0x3f]
      %v419 = vld [vmem:[%s416 + $0x10] sm:$0xff]
      %v420 = vld [vmem:[%s416 + $0x18] sm:$0x3f]
      %v421 = vld [vmem:[%s416 + $0x20] sm:$0xff]
      %v422 = vld [vmem:[%s416 + $0x28] sm:$0x3f]
      %v423 = vld [vmem:[%s416 + $0x30] sm:$0xff]
      %v424 = vld [vmem:[%s416 + $0x38] sm:$0x3f]
      %v425 = vld [vmem:[%s416 + $0x40] sm:$0xff]
      %v426 = vld [vmem:[%s416 + $0x48] sm:$0x3f]
      %v427 = vld [vmem:[%s416 + $0x50] sm:$0xff]
      %v428 = vld [vmem:[%s416 + $0x58] sm:$0x3f]
      %v429 = vld [vmem:[%s416 + $0x60] sm:$0xff]
      %v430 = vld [vmem:[%s416 + $0x68] sm:$0x3f]
      %v431 = vld [vmem:[%s416 + $0x70] sm:$0xff]
      %v432 = vld [vmem:[%s416 + $0x78] sm:$0x3f]
      %v433 = vlaneseq
      %v434 = vshrl.u32 %v433, 7
      %v435 = vsub.s32 0, %v434
      %v436 = vrot.slane %v406, %v435
      %v437 = vmul.f32 %v417, %v436
      %v438 = vmul.f32 %v418, %v436
      %v439 = vmul.f32 %v419, %v436
      %v440 = vmul.f32 %v420, %v436
      %v441 = vmul.f32 %v421, %v436
      %v442 = vmul.f32 %v422, %v436
      %v443 = vmul.f32 %v423, %v436
      %v444 = vmul.f32 %v424, %v436
      %v445 = vmul.f32 %v425, %v436
      %v446 = vmul.f32 %v426, %v436
      %v447 = vmul.f32 %v427, %v436
      %v448 = vmul.f32 %v428, %v436
      %v449 = vmul.f32 %v429, %v436
      %v450 = vmul.f32 %v430, %v436
      %v451 = vmul.f32 %v431, %v436
      %v452 = vmul.f32 %v432, %v436
      %v453 = vadd.f32 %v413, %v437
      %v454 = vadd.f32 %v413, %v438
      %v455 = vadd.f32 %v413, %v439
      %v456 = vadd.f32 %v413, %v440
      %v457 = vadd.f32 %v413, %v441
      %v458 = vadd.f32 %v413, %v442
      %v459 = vadd.f32 %v413, %v443
      %v460 = vadd.f32 %v413, %v444
      %v461 = vadd.f32 %v413, %v445
      %v462 = vadd.f32 %v413, %v446
      %v463 = vadd.f32 %v413, %v447
      %v464 = vadd.f32 %v413, %v448
      %v465 = vadd.f32 %v413, %v449
      %v466 = vadd.f32 %v413, %v450
      %v467 = vadd.f32 %v413, %v451
      %v468 = vadd.f32 %v413, %v452
      %v469 = vld [vmem:[%s416 + $0x1] sm:$0xff]
      %v470 = vld [vmem:[%s416 + $0x9] sm:$0x3f]
      %v471 = vld [vmem:[%s416 + $0x11] sm:$0xff]
      %v472 = vld [vmem:[%s416 + $0x19] sm:$0x3f]
      %v473 = vld [vmem:[%s416 + $0x21] sm:$0xff]
      %v474 = vld [vmem:[%s416 + $0x29] sm:$0x3f]
      %v475 = vld [vmem:[%s416 + $0x31] sm:$0xff]
      %v476 = vld [vmem:[%s416 + $0x39] sm:$0x3f]
      %v477 = vld [vmem:[%s416 + $0x41] sm:$0xff]
      %v478 = vld [vmem:[%s416 + $0x49] sm:$0x3f]
      %v479 = vld [vmem:[%s416 + $0x51] sm:$0xff]
      %v480 = vld [vmem:[%s416 + $0x59] sm:$0x3f]
      %v481 = vld [vmem:[%s416 + $0x61] sm:$0xff]
      %v482 = vld [vmem:[%s416 + $0x69] sm:$0x3f]
      %v483 = vld [vmem:[%s416 + $0x71] sm:$0xff]
      %v484 = vld [vmem:[%s416 + $0x79] sm:$0x3f]
      %v485 = vlaneseq
      %v486 = vshrl.u32 %v485, 7
      %v487 = vsub.s32 1, %v486
      %v488 = vrot.slane %v406, %v487
      %v489 = vmul.f32 %v469, %v488
      %v490 = vmul.f32 %v470, %v488
      %v491 = vmul.f32 %v471, %v488
      %v492 = vmul.f32 %v472, %v488
      %v493 = vmul.f32 %v473, %v488
      %v494 = vmul.f32 %v474, %v488
      %v495 = vmul.f32 %v475, %v488
      %v496 = vmul.f32 %v476, %v488
      %v497 = vmul.f32 %v477, %v488
      %v498 = vmul.f32 %v478, %v488
      %v499 = vmul.f32 %v479, %v488
      %v500 = vmul.f32 %v480, %v488
      %v501 = vmul.f32 %v481, %v488
      %v502 = vmul.f32 %v482, %v488
      %v503 = vmul.f32 %v483, %v488
      %v504 = vmul.f32 %v484, %v488
      %v505 = vadd.f32 %v453, %v489
      %v506 = vadd.f32 %v454, %v490
      %v507 = vadd.f32 %v455, %v491
      %v508 = vadd.f32 %v456, %v492
      %v509 = vadd.f32 %v457, %v493
      %v510 = vadd.f32 %v458, %v494
      %v511 = vadd.f32 %v459, %v495
      %v512 = vadd.f32 %v460, %v496
      %v513 = vadd.f32 %v461, %v497
      %v514 = vadd.f32 %v462, %v498
      %v515 = vadd.f32 %v463, %v499
      %v516 = vadd.f32 %v464, %v500
      %v517 = vadd.f32 %v465, %v501
      %v518 = vadd.f32 %v466, %v502
      %v519 = vadd.f32 %v467, %v503
      %v520 = vadd.f32 %v468, %v504
      %v521 = vld [vmem:[%s416 + $0x2] sm:$0xff]
      %v522 = vld [vmem:[%s416 + $0xa] sm:$0x3f]
      %v523 = vld [vmem:[%s416 + $0x12] sm:$0xff]
      %v524 = vld [vmem:[%s416 + $0x1a] sm:$0x3f]
      %v525 = vld [vmem:[%s416 + $0x22] sm:$0xff]
      %v526 = vld [vmem:[%s416 + $0x2a] sm:$0x3f]
      %v527 = vld [vmem:[%s416 + $0x32] sm:$0xff]
      %v528 = vld [vmem:[%s416 + $0x3a] sm:$0x3f]
      %v529 = vld [vmem:[%s416 + $0x42] sm:$0xff]
      %v530 = vld [vmem:[%s416 + $0x4a] sm:$0x3f]
      %v531 = vld [vmem:[%s416 + $0x52] sm:$0xff]
      %v532 = vld [vmem:[%s416 + $0x5a] sm:$0x3f]
      %v533 = vld [vmem:[%s416 + $0x62] sm:$0xff]
      %v534 = vld [vmem:[%s416 + $0x6a] sm:$0x3f]
      %v535 = vld [vmem:[%s416 + $0x72] sm:$0xff]
      %v536 = vld [vmem:[%s416 + $0x7a] sm:$0x3f]
      %v537 = vlaneseq
      %v538 = vshrl.u32 %v537, 7
      %v539 = vsub.s32 2, %v538
      %v540 = vrot.slane %v406, %v539
      %v541 = vmul.f32 %v521, %v540
      %v542 = vmul.f32 %v522, %v540
      %v543 = vmul.f32 %v523, %v540
      %v544 = vmul.f32 %v524, %v540
      %v545 = vmul.f32 %v525, %v540
      %v546 = vmul.f32 %v526, %v540
      %v547 = vmul.f32 %v527, %v540
      %v548 = vmul.f32 %v528, %v540
      %v549 = vmul.f32 %v529, %v540
      %v550 = vmul.f32 %v530, %v540
      %v551 = vmul.f32 %v531, %v540
      %v552 = vmul.f32 %v532, %v540
      %v553 = vmul.f32 %v533, %v540
      %v554 = vmul.f32 %v534, %v540
      %v555 = vmul.f32 %v535, %v540
      %v556 = vmul.f32 %v536, %v540
      %v557 = vadd.f32 %v505, %v541
      %v558 = vadd.f32 %v506, %v542
      %v559 = vadd.f32 %v507, %v543
      %v560 = vadd.f32 %v508, %v544
      %v561 = vadd.f32 %v509, %v545
      %v562 = vadd.f32 %v510, %v546
      %v563 = vadd.f32 %v511, %v547
      %v564 = vadd.f32 %v512, %v548
      %v565 = vadd.f32 %v513, %v549
      %v566 = vadd.f32 %v514, %v550
      %v567 = vadd.f32 %v515, %v551
      %v568 = vadd.f32 %v516, %v552
      %v569 = vadd.f32 %v517, %v553
      %v570 = vadd.f32 %v518, %v554
      %v571 = vadd.f32 %v519, %v555
      %v572 = vadd.f32 %v520, %v556
      %s573 = sadd.s32 16, %s415
      %s574 = scalar_lea.vmem [#allocation2], %s573
      %v575 = vld [vmem:[%s574] sm:$0xff]
      %v576 = vld [vmem:[%s574 + $0x8] sm:$0x3f]
      %v577 = vld [vmem:[%s574 + $0x10] sm:$0xff]
      %v578 = vld [vmem:[%s574 + $0x18] sm:$0x3f]
      %v579 = vld [vmem:[%s574 + $0x20] sm:$0xff]
      %v580 = vld [vmem:[%s574 + $0x28] sm:$0x3f]
      %v581 = vld [vmem:[%s574 + $0x30] sm:$0xff]
      %v582 = vld [vmem:[%s574 + $0x38] sm:$0x3f]
      %v583 = vld [vmem:[%s574 + $0x40] sm:$0xff]
      %v584 = vld [vmem:[%s574 + $0x48] sm:$0x3f]
      %v585 = vld [vmem:[%s574 + $0x50] sm:$0xff]
      %v586 = vld [vmem:[%s574 + $0x58] sm:$0x3f]
      %v587 = vld [vmem:[%s574 + $0x60] sm:$0xff]
      %v588 = vld [vmem:[%s574 + $0x68] sm:$0x3f]
      %v589 = vld [vmem:[%s574 + $0x70] sm:$0xff]
      %v590 = vld [vmem:[%s574 + $0x78] sm:$0x3f]
      %v591 = vlaneseq
      %v592 = vshrl.u32 %v591, 7
      %v593 = vsub.s32 3, %v592
      %v594 = vrot.slane %v406, %v593
      %v595 = vmul.f32 %v575, %v594
      %v596 = vmul.f32 %v576, %v594
      %v597 = vmul.f32 %v577, %v594
      %v598 = vmul.f32 %v578, %v594
      %v599 = vmul.f32 %v579, %v594
      %v600 = vmul.f32 %v580, %v594
      %v601 = vmul.f32 %v581, %v594
      %v602 = vmul.f32 %v582, %v594
      %v603 = vmul.f32 %v583, %v594
      %v604 = vmul.f32 %v584, %v594
      %v605 = vmul.f32 %v585, %v594
      %v606 = vmul.f32 %v586, %v594
      %v607 = vmul.f32 %v587, %v594
      %v608 = vmul.f32 %v588, %v594
      %v609 = vmul.f32 %v589, %v594
      %v610 = vmul.f32 %v590, %v594
      %v611 = vadd.f32 %v557, %v595
      %v612 = vadd.f32 %v558, %v596
      %v613 = vadd.f32 %v559, %v597
      %v614 = vadd.f32 %v560, %v598
      %v615 = vadd.f32 %v561, %v599
      %v616 = vadd.f32 %v562, %v600
      %v617 = vadd.f32 %v563, %v601
      %v618 = vadd.f32 %v564, %v602
      %v619 = vadd.f32 %v565, %v603
      %v620 = vadd.f32 %v566, %v604
      %v621 = vadd.f32 %v567, %v605
      %v622 = vadd.f32 %v568, %v606
      %v623 = vadd.f32 %v569, %v607
      %v624 = vadd.f32 %v570, %v608
      %v625 = vadd.f32 %v571, %v609
      %v626 = vadd.f32 %v572, %v610
      %v627 = vld [vmem:[%s574 + $0x1] sm:$0xff]
      %v628 = vld [vmem:[%s574 + $0x9] sm:$0x3f]
      %v629 = vld [vmem:[%s574 + $0x11] sm:$0xff]
      %v630 = vld [vmem:[%s574 + $0x19] sm:$0x3f]
      %v631 = vld [vmem:[%s574 + $0x21] sm:$0xff]
      %v632 = vld [vmem:[%s574 + $0x29] sm:$0x3f]
      %v633 = vld [vmem:[%s574 + $0x31] sm:$0xff]
      %v634 = vld [vmem:[%s574 + $0x39] sm:$0x3f]
      %v635 = vld [vmem:[%s574 + $0x41] sm:$0xff]
      %v636 = vld [vmem:[%s574 + $0x49] sm:$0x3f]
      %v637 = vld [vmem:[%s574 + $0x51] sm:$0xff]
      %v638 = vld [vmem:[%s574 + $0x59] sm:$0x3f]
      %v639 = vld [vmem:[%s574 + $0x61] sm:$0xff]
      %v640 = vld [vmem:[%s574 + $0x69] sm:$0x3f]
      %v641 = vld [vmem:[%s574 + $0x71] sm:$0xff]
      %v642 = vld [vmem:[%s574 + $0x79] sm:$0x3f]
      %v643 = vlaneseq
      %v644 = vshrl.u32 %v643, 7
      %v645 = vsub.s32 4, %v644
      %v646 = vrot.slane %v406, %v645
      %v647 = vmul.f32 %v627, %v646
      %v648 = vmul.f32 %v628, %v646
      %v649 = vmul.f32 %v629, %v646
      %v650 = vmul.f32 %v630, %v646
      %v651 = vmul.f32 %v631, %v646
      %v652 = vmul.f32 %v632, %v646
      %v653 = vmul.f32 %v633, %v646
      %v654 = vmul.f32 %v634, %v646
      %v655 = vmul.f32 %v635, %v646
      %v656 = vmul.f32 %v636, %v646
      %v657 = vmul.f32 %v637, %v646
      %v658 = vmul.f32 %v638, %v646
      %v659 = vmul.f32 %v639, %v646
      %v660 = vmul.f32 %v640, %v646
      %v661 = vmul.f32 %v641, %v646
      %v662 = vmul.f32 %v642, %v646
      %v663 = vadd.f32 %v611, %v647
      %v664 = vadd.f32 %v612, %v648
      %v665 = vadd.f32 %v613, %v649
      %v666 = vadd.f32 %v614, %v650
      %v667 = vadd.f32 %v615, %v651
      %v668 = vadd.f32 %v616, %v652
      %v669 = vadd.f32 %v617, %v653
      %v670 = vadd.f32 %v618, %v654
      %v671 = vadd.f32 %v619, %v655
      %v672 = vadd.f32 %v620, %v656
      %v673 = vadd.f32 %v621, %v657
      %v674 = vadd.f32 %v622, %v658
      %v675 = vadd.f32 %v623, %v659
      %v676 = vadd.f32 %v624, %v660
      %v677 = vadd.f32 %v625, %v661
      %v678 = vadd.f32 %v626, %v662
      %v679 = vld [vmem:[%s574 + $0x2] sm:$0xff]
      %v680 = vld [vmem:[%s574 + $0xa] sm:$0x3f]
      %v681 = vld [vmem:[%s574 + $0x12] sm:$0xff]
      %v682 = vld [vmem:[%s574 + $0x1a] sm:$0x3f]
      %v683 = vld [vmem:[%s574 + $0x22] sm:$0xff]
      %v684 = vld [vmem:[%s574 + $0x2a] sm:$0x3f]
      %v685 = vld [vmem:[%s574 + $0x32] sm:$0xff]
      %v686 = vld [vmem:[%s574 + $0x3a] sm:$0x3f]
      %v687 = vld [vmem:[%s574 + $0x42] sm:$0xff]
      %v688 = vld [vmem:[%s574 + $0x4a] sm:$0x3f]
      %v689 = vld [vmem:[%s574 + $0x52] sm:$0xff]
      %v690 = vld [vmem:[%s574 + $0x5a] sm:$0x3f]
      %v691 = vld [vmem:[%s574 + $0x62] sm:$0xff]
      %v692 = vld [vmem:[%s574 + $0x6a] sm:$0x3f]
      %v693 = vld [vmem:[%s574 + $0x72] sm:$0xff]
      %v694 = vld [vmem:[%s574 + $0x7a] sm:$0x3f]
      %v695 = vlaneseq
      %v696 = vshrl.u32 %v695, 7
      %v697 = vsub.s32 5, %v696
      %v698 = vrot.slane %v406, %v697
      %v699 = vmul.f32 %v679, %v698
      %v700 = vmul.f32 %v680, %v698
      %v701 = vmul.f32 %v681, %v698
      %v702 = vmul.f32 %v682, %v698
      %v703 = vmul.f32 %v683, %v698
      %v704 = vmul.f32 %v684, %v698
      %v705 = vmul.f32 %v685, %v698
      %v706 = vmul.f32 %v686, %v698
      %v707 = vmul.f32 %v687, %v698
      %v708 = vmul.f32 %v688, %v698
      %v709 = vmul.f32 %v689, %v698
      %v710 = vmul.f32 %v690, %v698
      %v711 = vmul.f32 %v691, %v698
      %v712 = vmul.f32 %v692, %v698
      %v713 = vmul.f32 %v693, %v698
      %v714 = vmul.f32 %v694, %v698
      %v715 = vadd.f32 %v663, %v699
      %v716 = vadd.f32 %v664, %v700
      %v717 = vadd.f32 %v665, %v701
      %v718 = vadd.f32 %v666, %v702
      %v719 = vadd.f32 %v667, %v703
      %v720 = vadd.f32 %v668, %v704
      %v721 = vadd.f32 %v669, %v705
      %v722 = vadd.f32 %v670, %v706
      %v723 = vadd.f32 %v671, %v707
      %v724 = vadd.f32 %v672, %v708
      %v725 = vadd.f32 %v673, %v709
      %v726 = vadd.f32 %v674, %v710
      %v727 = vadd.f32 %v675, %v711
      %v728 = vadd.f32 %v676, %v712
      %v729 = vadd.f32 %v677, %v713
      %v730 = vadd.f32 %v678, %v714
      %s731 = sadd.s32 32, %s415
      %s732 = scalar_lea.vmem [#allocation2], %s731
      %v733 = vld [vmem:[%s732] sm:$0xff]
      %v734 = vld [vmem:[%s732 + $0x8] sm:$0x3f]
      %v735 = vld [vmem:[%s732 + $0x10] sm:$0xff]
      %v736 = vld [vmem:[%s732 + $0x18] sm:$0x3f]
      %v737 = vld [vmem:[%s732 + $0x20] sm:$0xff]
      %v738 = vld [vmem:[%s732 + $0x28] sm:$0x3f]
      %v739 = vld [vmem:[%s732 + $0x30] sm:$0xff]
      %v740 = vld [vmem:[%s732 + $0x38] sm:$0x3f]
      %v741 = vld [vmem:[%s732 + $0x40] sm:$0xff]
      %v742 = vld [vmem:[%s732 + $0x48] sm:$0x3f]
      %v743 = vld [vmem:[%s732 + $0x50] sm:$0xff]
      %v744 = vld [vmem:[%s732 + $0x58] sm:$0x3f]
      %v745 = vld [vmem:[%s732 + $0x60] sm:$0xff]
      %v746 = vld [vmem:[%s732 + $0x68] sm:$0x3f]
      %v747 = vld [vmem:[%s732 + $0x70] sm:$0xff]
      %v748 = vld [vmem:[%s732 + $0x78] sm:$0x3f]
      %v749 = vlaneseq
      %v750 = vshrl.u32 %v749, 7
      %v751 = vsub.s32 6, %v750
      %v752 = vrot.slane %v406, %v751
      %v753 = vmul.f32 %v733, %v752
      %v754 = vmul.f32 %v734, %v752
      %v755 = vmul.f32 %v735, %v752
      %v756 = vmul.f32 %v736, %v752
      %v757 = vmul.f32 %v737, %v752
      %v758 = vmul.f32 %v738, %v752
      %v759 = vmul.f32 %v739, %v752
      %v760 = vmul.f32 %v740, %v752
      %v761 = vmul.f32 %v741, %v752
      %v762 = vmul.f32 %v742, %v752
      %v763 = vmul.f32 %v743, %v752
      %v764 = vmul.f32 %v744, %v752
      %v765 = vmul.f32 %v745, %v752
      %v766 = vmul.f32 %v746, %v752
      %v767 = vmul.f32 %v747, %v752
      %v768 = vmul.f32 %v748, %v752
      %v769 = vadd.f32 %v715, %v753
      %v770 = vadd.f32 %v716, %v754
      %v771 = vadd.f32 %v717, %v755
      %v772 = vadd.f32 %v718, %v756
      %v773 = vadd.f32 %v719, %v757
      %v774 = vadd.f32 %v720, %v758
      %v775 = vadd.f32 %v721, %v759
      %v776 = vadd.f32 %v722, %v760
      %v777 = vadd.f32 %v723, %v761
      %v778 = vadd.f32 %v724, %v762
      %v779 = vadd.f32 %v725, %v763
      %v780 = vadd.f32 %v726, %v764
      %v781 = vadd.f32 %v727, %v765
      %v782 = vadd.f32 %v728, %v766
      %v783 = vadd.f32 %v729, %v767
      %v784 = vadd.f32 %v730, %v768
      %v785 = vld [vmem:[%s732 + $0x1] sm:$0xff]
      %v786 = vld [vmem:[%s732 + $0x9] sm:$0x3f]
      %v787 = vld [vmem:[%s732 + $0x11] sm:$0xff]
      %v788 = vld [vmem:[%s732 + $0x19] sm:$0x3f]
      %v789 = vld [vmem:[%s732 + $0x21] sm:$0xff]
      %v790 = vld [vmem:[%s732 + $0x29] sm:$0x3f]
      %v791 = vld [vmem:[%s732 + $0x31] sm:$0xff]
      %v792 = vld [vmem:[%s732 + $0x39] sm:$0x3f]
      %v793 = vld [vmem:[%s732 + $0x41] sm:$0xff]
      %v794 = vld [vmem:[%s732 + $0x49] sm:$0x3f]
      %v795 = vld [vmem:[%s732 + $0x51] sm:$0xff]
      %v796 = vld [vmem:[%s732 + $0x59] sm:$0x3f]
      %v797 = vld [vmem:[%s732 + $0x61] sm:$0xff]
      %v798 = vld [vmem:[%s732 + $0x69] sm:$0x3f]
      %v799 = vld [vmem:[%s732 + $0x71] sm:$0xff]
      %v800 = vld [vmem:[%s732 + $0x79] sm:$0x3f]
      %v801 = vlaneseq
      %v802 = vshrl.u32 %v801, 7
      %v803 = vsub.s32 7, %v802
      %v804 = vrot.slane %v406, %v803
      %v805 = vmul.f32 %v785, %v804
      %v806 = vmul.f32 %v786, %v804
      %v807 = vmul.f32 %v787, %v804
      %v808 = vmul.f32 %v788, %v804
      %v809 = vmul.f32 %v789, %v804
      %v810 = vmul.f32 %v790, %v804
      %v811 = vmul.f32 %v791, %v804
      %v812 = vmul.f32 %v792, %v804
      %v813 = vmul.f32 %v793, %v804
      %v814 = vmul.f32 %v794, %v804
      %v815 = vmul.f32 %v795, %v804
      %v816 = vmul.f32 %v796, %v804
      %v817 = vmul.f32 %v797, %v804
      %v818 = vmul.f32 %v798, %v804
      %v819 = vmul.f32 %v799, %v804
      %v820 = vmul.f32 %v800, %v804
      %v821 = vadd.f32 %v769, %v805
      %v822 = vadd.f32 %v770, %v806
      %v823 = vadd.f32 %v771, %v807
      %v824 = vadd.f32 %v772, %v808
      %v825 = vadd.f32 %v773, %v809
      %v826 = vadd.f32 %v774, %v810
      %v827 = vadd.f32 %v775, %v811
      %v828 = vadd.f32 %v776, %v812
      %v829 = vadd.f32 %v777, %v813
      %v830 = vadd.f32 %v778, %v814
      %v831 = vadd.f32 %v779, %v815
      %v832 = vadd.f32 %v780, %v816
      %v833 = vadd.f32 %v781, %v817
      %v834 = vadd.f32 %v782, %v818
      %v835 = vadd.f32 %v783, %v819
      %v836 = vadd.f32 %v784, %v820
      %v837 = vld [vmem:[%s732 + $0x2] sm:$0xff]
      %v838 = vld [vmem:[%s732 + $0xa] sm:$0x3f]
      %v839 = vld [vmem:[%s732 + $0x12] sm:$0xff]
      %v840 = vld [vmem:[%s732 + $0x1a] sm:$0x3f]
      %v841 = vld [vmem:[%s732 + $0x22] sm:$0xff]
      %v842 = vld [vmem:[%s732 + $0x2a] sm:$0x3f]
      %v843 = vld [vmem:[%s732 + $0x32] sm:$0xff]
      %v844 = vld [vmem:[%s732 + $0x3a] sm:$0x3f]
      %v845 = vld [vmem:[%s732 + $0x42] sm:$0xff]
      %v846 = vld [vmem:[%s732 + $0x4a] sm:$0x3f]
      %v847 = vld [vmem:[%s732 + $0x52] sm:$0xff]
      %v848 = vld [vmem:[%s732 + $0x5a] sm:$0x3f]
      %v849 = vld [vmem:[%s732 + $0x62] sm:$0xff]
      %v850 = vld [vmem:[%s732 + $0x6a] sm:$0x3f]
      %v851 = vld [vmem:[%s732 + $0x72] sm:$0xff]
      %v852 = vld [vmem:[%s732 + $0x7a] sm:$0x3f]
      %v853 = vlaneseq
      %v854 = vshrl.u32 %v853, 7
      %v855 = vsub.s32 0, %v854
      %v856 = vrot.slane %v407, %v855
      %v857 = vmul.f32 %v837, %v856
      %v858 = vmul.f32 %v838, %v856
      %v859 = vmul.f32 %v839, %v856
      %v860 = vmul.f32 %v840, %v856
      %v861 = vmul.f32 %v841, %v856
      %v862 = vmul.f32 %v842, %v856
      %v863 = vmul.f32 %v843, %v856
      %v864 = vmul.f32 %v844, %v856
      %v865 = vmul.f32 %v845, %v856
      %v866 = vmul.f32 %v846, %v856
      %v867 = vmul.f32 %v847, %v856
      %v868 = vmul.f32 %v848, %v856
      %v869 = vmul.f32 %v849, %v856
      %v870 = vmul.f32 %v850, %v856
      %v871 = vmul.f32 %v851, %v856
      %v872 = vmul.f32 %v852, %v856
      %v873 = vadd.f32 %v821, %v857
      %v874 = vadd.f32 %v822, %v858
      %v875 = vadd.f32 %v823, %v859
      %v876 = vadd.f32 %v824, %v860
      %v877 = vadd.f32 %v825, %v861
      %v878 = vadd.f32 %v826, %v862
      %v879 = vadd.f32 %v827, %v863
      %v880 = vadd.f32 %v828, %v864
      %v881 = vadd.f32 %v829, %v865
      %v882 = vadd.f32 %v830, %v866
      %v883 = vadd.f32 %v831, %v867
      %v884 = vadd.f32 %v832, %v868
      %v885 = vadd.f32 %v833, %v869
      %v886 = vadd.f32 %v834, %v870
      %v887 = vadd.f32 %v835, %v871
      %v888 = vadd.f32 %v836, %v872
      %889 = vst [vmem:[%s194] sm:$0xff] %v873
      %890 = vst [vmem:[%s194 + $0x8] sm:$0x3f] %v874
      %891 = vst [vmem:[%s194 + $0x10] sm:$0xff] %v875
      %892 = vst [vmem:[%s194 + $0x18] sm:$0x3f] %v876
      %893 = vst [vmem:[%s194 + $0x20] sm:$0xff] %v877
      %894 = vst [vmem:[%s194 + $0x28] sm:$0x3f] %v878
      %895 = vst [vmem:[%s194 + $0x30] sm:$0xff] %v879
      %896 = vst [vmem:[%s194 + $0x38] sm:$0x3f] %v880
      %897 = vst [vmem:[%s194 + $0x40] sm:$0xff] %v881
      %898 = vst [vmem:[%s194 + $0x48] sm:$0x3f] %v882
      %899 = vst [vmem:[%s194 + $0x50] sm:$0xff] %v883
      %900 = vst [vmem:[%s194 + $0x58] sm:$0x3f] %v884
      %901 = vst [vmem:[%s194 + $0x60] sm:$0xff] %v885
      %902 = vst [vmem:[%s194 + $0x68] sm:$0x3f] %v886
      %903 = vst [vmem:[%s194 + $0x70] sm:$0xff] %v887
      %904 = vst [vmem:[%s194 + $0x78] sm:$0x3f] %v888
      %s905 = smul.u32 8, %s21
      %p906 = scmp.lt.s32.totalorder %s20, 1
      %s907 = scalar_select %p906, %s20, 1
      %p908 = scmp.lt.s32.totalorder %s905, 15
      %s909 = scalar_select %p908, %s905, 15
      %p910 = scmp.lt.s32.totalorder %s19, 0
      %s911 = scalar_select %p910, %s19, 0
      %s912 = smul.addr %s909, 2
      %s913 = sadd.s32 %s911, %s912
      %s914 = smul.addr %s907, 32
      %s915 = sadd.s32 %s913, %s914
      %s916 = smul.addr %s915, 8
      %s917 = scalar_lea.vmem %s3, %s916
      // Predicated region
      $region105: #{depthwise_conv2d.1} parent=27 // pred_check
        %p918 = pneg %p107
      $region106: #{depthwise_conv2d.1} parent=27 // pred_check_branch
        %920 = sbr.rel (%p918) target = $region108
      $region107: #{depthwise_conv2d.1} parent=27 // pred_region
        %s921 = smul.u32 8, %s21
      $region108: #{depthwise_conv2d.1} parent=27 // pred_fallthru
        _
    $region28: #{depthwise_conv2d.1} parent=5 // pred_fallthru
      _
    %p922 = scmp.le.s32.totalorder 2, %s9
    // Predicated region
    $region109: #{depthwise_conv2d.1} parent=5 // pred_check
      %p923 = pneg %p922
    $region110: #{depthwise_conv2d.1} parent=5 // pred_check_branch
      %925 = sbr.rel (%p923) target = $region112
    $region111: #{depthwise_conv2d.1} parent=5 // pred_region
      %s926 = ssub.s32 %s9, 2
      // Predicated region
      $region113: #{depthwise_conv2d.1} parent=111 // pred_check
        %p927 = pneg %p113
      $region114: #{depthwise_conv2d.1} parent=111 // pred_check_branch
        %929 = sbr.rel (%p927) target = $region116
      $region115: #{depthwise_conv2d.1} parent=111 // pred_region
        %s930 = smul.u32 8, %s24
        %p931 = scmp.lt.s32.totalorder %s23, 1
        %s932 = scalar_select %p931, %s23, 1
        %p933 = scmp.lt.s32.totalorder %s930, 15
        %s934 = scalar_select %p933, %s930, 15
        %p935 = scmp.lt.s32.totalorder %s22, 0
        %s936 = scalar_select %p935, %s22, 0
        %s937 = smul.addr %s934, 2
        %s938 = sadd.s32 %s936, %s937
        %s939 = smul.addr %s932, 32
        %s940 = sadd.s32 %s938, %s939
        %s941 = smul.addr %s940, 8
        %s942 = scalar_lea.vmem %s3, %s941
      $region116: #{depthwise_conv2d.1} parent=111 // pred_fallthru
        _
    $region112: #{depthwise_conv2d.1} parent=5 // pred_fallthru
      _
  $region6: #{depthwise_conv2d.1} parent=0 // loop_footer
    %s13 = sadd.s32 1, %s9
  $region7: #{depthwise_conv2d.1} parent=0 // loop_footer_branch
    %8 = sbr.rel target = $region3
  $region8: #{depthwise_conv2d.1} parent=0 // loop_exit
    _
  %943 = vsyncmov [#allocation3]
  %s944 = vpop.sfrf %943
  %p945 = scmp.eq.s32.totalorder %s944, 0
  %p946 = pneg %p945
  %948 = shalt.err (%p946)
  %s949 = scalar_lea.sflag [#allocation3], 1
  %950 = vsyncmov %s949
  %s951 = vpop.sfrf %950
  %p952 = scmp.eq.s32.totalorder %s951, 0
  %p953 = pneg %p952
  %955 = shalt.err (%p953)

</llo_original>
